<compile_context>
chip_gen: v6e
topology: v6e:2x2x1
jax: 0.10.0
libtpu: 0.0.40
codegen_flags: <defaults>
</compile_context>

<pallas_src>
import functools

import jax
import jax.numpy as jnp
from jax.experimental import pallas as pl
from jax.experimental.pallas import tpu as pltpu


def _round_up(n, m):
    return ((n + m - 1) // m) * m


# ---------------------- fused LayerNorm + Linear kernel ----------------------
def _prenorm_linear_kernel(x_ref, g_ref, bt_ref, w_ref, b_ref, o_ref, *,
                           eps, d_true):
    # x_ref: (tm, Dp) block.  Padding columns/rows are zero, so sums over the
    # padded width equal sums over the true width; divide by the TRUE D.
    x = x_ref[...].astype(jnp.float32)
    inv_d = 1.0 / d_true
    s1 = jnp.sum(x, axis=-1, keepdims=True)          # one pass: sum(x)
    s2 = jnp.sum(x * x, axis=-1, keepdims=True)      #           sum(x^2)
    mean = s1 * inv_d
    var = s2 * inv_d - mean * mean                   # E[x^2] - E[x]^2
    inv = jax.lax.rsqrt(var + eps)
    y = (x - mean) * inv
    # gamma/beta are zero in padded columns -> padded y columns become 0.
    y = y * g_ref[...].astype(jnp.float32) + bt_ref[...].astype(jnp.float32)
    # Matmul against the resident weight block (zero-padded rows contribute 0).
    acc = jnp.dot(y.astype(w_ref.dtype), w_ref[...],
                  preferred_element_type=jnp.float32)
    o_ref[...] = (acc + b_ref[...].astype(jnp.float32)).astype(o_ref.dtype)


def prenorm_linear_pallas(x2d, gamma, beta, w, b, *, eps=1e-5, tile_rows=256):
    """Fused LayerNorm(D) + Linear(D->Dout) on a (N, D) input."""
    N, D = x2d.shape
    Dout = w.shape[1]

    # Lane-dense padded widths (multiples of 128).
    Dp = max(_round_up(D, 128), 128)
    DoutP = max(_round_up(Dout, 128), 128)

    # 8-aligned row tile; pipeline/shard over rows when N is large.
    tm = min(tile_rows, _round_up(N, 8))
    tm = _round_up(tm, 8)
    Np = _round_up(N, tm)

    # Output-column tile: keep whole padded width resident when modest,
    # otherwise tile at 256 (v6e/v7x MXU width).
    tn = DoutP if DoutP <= 512 else 256
    # TODO(synk): for very large D (>~8K) add K-axis tiling with an f32 VMEM
    # accumulator; here W is kept fully resident in VMEM via a constant
    # index_map, which is the right call for typical transformer dims.

    # Zero-pad everything (zeros are neutral for the sums and the matmul).
    xp = jnp.zeros((Np, Dp), x2d.dtype).at[:N, :D].set(x2d)
    gp = jnp.zeros((1, Dp), gamma.dtype).at[0, :D].set(gamma)
    btp = jnp.zeros((1, Dp), beta.dtype).at[0, :D].set(beta)
    wp = jnp.zeros((Dp, DoutP), w.dtype).at[:D, :Dout].set(w)
    bp = jnp.zeros((1, DoutP), b.dtype).at[0, :Dout].set(b)

    grid = (Np // tm, DoutP // tn)
    out = pl.pallas_call(
        functools.partial(_prenorm_linear_kernel, eps=eps, d_true=float(D)),
        out_shape=jax.ShapeDtypeStruct((Np, DoutP), x2d.dtype),
        grid_spec=pltpu.PrefetchScalarGridSpec(
            num_scalar_prefetch=0,
            grid=grid,
            in_specs=[
                pl.BlockSpec((tm, Dp), lambda i, j: (i, 0)),    # x rows
                pl.BlockSpec((1, Dp), lambda i, j: (0, 0)),     # gamma (resident)
                pl.BlockSpec((1, Dp), lambda i, j: (0, 0)),     # beta  (resident)
                pl.BlockSpec((Dp, tn), lambda i, j: (0, j)),    # W     (resident over i)
                pl.BlockSpec((1, tn), lambda i, j: (0, j)),     # bias  (resident over i)
            ],
            out_specs=pl.BlockSpec((tm, tn), lambda i, j: (i, j)),
        ),
        compiler_params=pltpu.CompilerParams(
            dimension_semantics=("parallel", "parallel"),
            vmem_limit_bytes=64 * 1024 * 1024,
        ),
    )(xp, gp, btp, wp, bp)
    return out[:N, :Dout]


# ------------------- standalone LayerNorm (for arbitrary fn) -----------------
def _layernorm_kernel(x_ref, g_ref, bt_ref, o_ref, *, eps, d_true):
    x = x_ref[...].astype(jnp.float32)
    inv_d = 1.0 / d_true
    s1 = jnp.sum(x, axis=-1, keepdims=True)
    s2 = jnp.sum(x * x, axis=-1, keepdims=True)
    mean = s1 * inv_d
    var = s2 * inv_d - mean * mean
    inv = jax.lax.rsqrt(var + eps)
    y = (x - mean) * inv
    o_ref[...] = (y * g_ref[...].astype(jnp.float32)
                  + bt_ref[...].astype(jnp.float32)).astype(o_ref.dtype)


def layernorm_pallas(x2d, gamma, beta, *, eps=1e-5, tile_rows=256):
    N, D = x2d.shape
    Dp = max(_round_up(D, 128), 128)
    tm = min(tile_rows, _round_up(N, 8))
    tm = _round_up(tm, 8)
    Np = _round_up(N, tm)

    xp = jnp.zeros((Np, Dp), x2d.dtype).at[:N, :D].set(x2d)
    gp = jnp.zeros((1, Dp), gamma.dtype).at[0, :D].set(gamma)
    btp = jnp.zeros((1, Dp), beta.dtype).at[0, :D].set(beta)

    out = pl.pallas_call(
        functools.partial(_layernorm_kernel, eps=eps, d_true=float(D)),
        out_shape=jax.ShapeDtypeStruct((Np, Dp), x2d.dtype),
        grid_spec=pltpu.PrefetchScalarGridSpec(
            num_scalar_prefetch=0,
            grid=(Np // tm,),
            in_specs=[
                pl.BlockSpec((tm, Dp), lambda i: (i, 0)),
                pl.BlockSpec((1, Dp), lambda i: (0, 0)),
                pl.BlockSpec((1, Dp), lambda i: (0, 0)),
            ],
            out_specs=pl.BlockSpec((tm, Dp), lambda i: (i, 0)),
        ),
        compiler_params=pltpu.CompilerParams(
            dimension_semantics=("parallel",),
            vmem_limit_bytes=64 * 1024 * 1024,
        ),
    )(xp, gp, btp)
    return out[:N, :D]


# ---------------------------------- PreNorm ----------------------------------
def pre_norm(x, gamma, beta, fn, *, eps=1e-5, **kwargs):
    """Generic PreNorm.forward: fn(LayerNorm(x), **kwargs). x: (..., D)."""
    D = x.shape[-1]
    y = layernorm_pallas(x.reshape(-1, D), gamma, beta, eps=eps)
    return fn(y.reshape(x.shape), **kwargs)


def pre_norm_linear(x, gamma, beta, w, b, *, eps=1e-5):
    """Fused fast path: PreNorm with fn = Linear(D -> Dout). x: (..., D)."""
    D = x.shape[-1]
    Dout = w.shape[1]
    y2d = prenorm_linear_pallas(x.reshape(-1, D), gamma, beta, w, b, eps=eps)
    return y2d.reshape(x.shape[:-1] + (Dout,))


if __name__ == "__main__":
    key = jax.random.PRNGKey(0)
    B, S, D = 2, 8, 32

    k_x, k_w, k_b = jax.random.split(key, 3)
    x = jax.random.normal(k_x, (B, S, D), dtype=jnp.float32)

    # LayerNorm params (PyTorch init: weight=1, bias=0)
    gamma = jnp.ones((D,), dtype=jnp.float32)
    beta = jnp.zeros((D,), dtype=jnp.float32)

    # Example wrapped fn: Linear(D -> D), deterministic init.
    w = jax.random.normal(k_w, (D, D), dtype=jnp.float32) * 0.02
    b = jax.random.normal(k_b, (D,), dtype=jnp.float32) * 0.02

    # Fused LayerNorm + Linear (single pallas_call, no HBM round-trip).
    out = pre_norm_linear(x, gamma, beta, w, b)
    out = jax.block_until_ready(out)

    # Generic path (standalone LN kernel + arbitrary fn) for completeness.
    out_generic = pre_norm(x, gamma, beta, lambda y: y @ w + b)
    out_generic = jax.block_until_ready(out_generic)

    # Reference check in plain JAX.
    mean = jnp.mean(x, axis=-1, keepdims=True)
    var = jnp.mean((x - mean) ** 2, axis=-1, keepdims=True)
    y_ref = (x - mean) / jnp.sqrt(var + 1e-5) * gamma + beta
    out_ref = y_ref @ w + b

    assert out.shape == (B, S, D)
    assert jnp.allclose(out, out_ref, atol=1e-4, rtol=1e-4)
    assert jnp.allclose(out_generic, out_ref, atol=1e-4, rtol=1e-4)

    print("KERNEL_OK")
</pallas_src>

<mosaic_0001>
module attributes {stable_mosaic.version = 11 : i64} {
  func.func @_prenorm_linear_kernel(%arg0: i32, %arg1: i32, %arg2: memref<16x128xf32, #tpu.memory_space<vmem>>, %arg3: memref<1x128xf32, #tpu.memory_space<vmem>>, %arg4: memref<1x128xf32, #tpu.memory_space<vmem>>, %arg5: memref<128x128xf32, #tpu.memory_space<vmem>>, %arg6: memref<1x128xf32, #tpu.memory_space<vmem>>, %arg7: memref<16x128xf32, #tpu.memory_space<vmem>>) attributes {dimension_semantics = [#tpu.dimension_semantics<parallel>, #tpu.dimension_semantics<parallel>], iteration_bounds = array<i64: 1, 1>, scalar_prefetch = 0 : i64, scratch_operands = 0 : i64, tpu.core_type = #tpu.core_type<tc>, window_params = [{transform_indices = @transform_0, window_bounds = array<i64: 16, 128>}, {pipeline_mode = #tpu.pipeline_mode<synchronous>, transform_indices = @transform_1, window_bounds = array<i64: 1, 128>}, {pipeline_mode = #tpu.pipeline_mode<synchronous>, transform_indices = @transform_2, window_bounds = array<i64: 1, 128>}, {transform_indices = @transform_3, window_bounds = array<i64: 128, 128>}, {transform_indices = @transform_4, window_bounds = array<i64: 1, 128>}, {transform_indices = @transform_5, window_bounds = array<i64: 16, 128>}]} {
    %c0 = arith.constant 0 : index
    %c0_0 = arith.constant 0 : index
    %0 = vector.load %arg2[%c0, %c0_0] : memref<16x128xf32, #tpu.memory_space<vmem>>, vector<16x128xf32>
    %cst = arith.constant dense<0.000000e+00> : vector<16xf32>
    %1 = vector.multi_reduction <add>, %0, %cst [1] : vector<16x128xf32> to vector<16xf32>
    %2 = vector.shape_cast %1 : vector<16xf32> to vector<16x1xf32>
    %3 = arith.mulf %0, %0 : vector<16x128xf32>
    %cst_1 = arith.constant dense<0.000000e+00> : vector<16xf32>
    %4 = vector.multi_reduction <add>, %3, %cst_1 [1] : vector<16x128xf32> to vector<16xf32>
    %5 = vector.shape_cast %4 : vector<16xf32> to vector<16x1xf32>
    %cst_2 = arith.constant 3.125000e-02 : f32
    %6 = vector.broadcast %cst_2 : f32 to vector<16x1xf32>
    %7 = arith.mulf %2, %6 : vector<16x1xf32>
    %cst_3 = arith.constant 3.125000e-02 : f32
    %8 = vector.broadcast %cst_3 : f32 to vector<16x1xf32>
    %9 = arith.mulf %5, %8 : vector<16x1xf32>
    %10 = arith.mulf %7, %7 : vector<16x1xf32>
    %11 = arith.subf %9, %10 : vector<16x1xf32>
    %cst_4 = arith.constant 9.99999974E-6 : f32
    %12 = vector.broadcast %cst_4 : f32 to vector<16x1xf32>
    %13 = arith.addf %11, %12 : vector<16x1xf32>
    %14 = math.rsqrt %13 : vector<16x1xf32>
    %15 = vector.broadcast %7 : vector<16x1xf32> to vector<16x128xf32>
    %16 = arith.subf %0, %15 : vector<16x128xf32>
    %17 = vector.broadcast %14 : vector<16x1xf32> to vector<16x128xf32>
    %18 = arith.mulf %16, %17 : vector<16x128xf32>
    %c0_5 = arith.constant 0 : index
    %c0_6 = arith.constant 0 : index
    %19 = vector.load %arg3[%c0_5, %c0_6] : memref<1x128xf32, #tpu.memory_space<vmem>>, vector<1x128xf32>
    %20 = vector.broadcast %19 : vector<1x128xf32> to vector<16x128xf32>
    %21 = arith.mulf %18, %20 : vector<16x128xf32>
    %c0_7 = arith.constant 0 : index
    %c0_8 = arith.constant 0 : index
    %22 = vector.load %arg4[%c0_7, %c0_8] : memref<1x128xf32, #tpu.memory_space<vmem>>, vector<1x128xf32>
    %23 = vector.broadcast %22 : vector<1x128xf32> to vector<16x128xf32>
    %24 = arith.addf %21, %23 : vector<16x128xf32>
    %c0_9 = arith.constant 0 : index
    %c0_10 = arith.constant 0 : index
    %25 = vector.load %arg5[%c0_9, %c0_10] : memref<128x128xf32, #tpu.memory_space<vmem>>, vector<128x128xf32>
    %cst_11 = arith.constant dense<0.000000e+00> : vector<16x128xf32>
    %26 = tpu.matmul %24, %25, %cst_11 {dimension_numbers = #tpu.dot_dimension_numbers<[1], [0], [0], [1], [0, 0, 1, 1], [], []>} : vector<16x128xf32>, vector<128x128xf32>, vector<16x128xf32> -> vector<16x128xf32>
    %c0_12 = arith.constant 0 : index
    %c0_13 = arith.constant 0 : index
    %27 = vector.load %arg6[%c0_12, %c0_13] : memref<1x128xf32, #tpu.memory_space<vmem>>, vector<1x128xf32>
    %28 = vector.broadcast %27 : vector<1x128xf32> to vector<16x128xf32>
    %29 = arith.addf %26, %28 : vector<16x128xf32>
    %c0_14 = arith.constant 0 : index
    %c0_15 = arith.constant 0 : index
    %30 = vector.load %arg7[%c0_14, %c0_15] : memref<16x128xf32, #tpu.memory_space<vmem>>, vector<16x128xf32>
    tpu.vector_store %arg7[%c0_14, %c0_15], %29 {strides = array<i32>} : memref<16x128xf32, #tpu.memory_space<vmem>>, vector<16x128xf32>,
    return
  }
  func.func @transform_0(%arg0: i32, %arg1: i32) -> (i32, i32) {
    %c0_i32 = arith.constant 0 : i32
    %c0_i32_0 = arith.constant 0 : i32
    return %arg0, %c0_i32 : i32, i32
  }
  func.func @transform_1(%arg0: i32, %arg1: i32) -> (i32, i32) {
    %c0_i32 = arith.constant 0 : i32
    %c0_i32_0 = arith.constant 0 : i32
    %c0_i32_1 = arith.constant 0 : i32
    return %c0_i32, %c0_i32_0 : i32, i32
  }
  func.func @transform_2(%arg0: i32, %arg1: i32) -> (i32, i32) {
    %c0_i32 = arith.constant 0 : i32
    %c0_i32_0 = arith.constant 0 : i32
    %c0_i32_1 = arith.constant 0 : i32
    return %c0_i32, %c0_i32_0 : i32, i32
  }
  func.func @transform_3(%arg0: i32, %arg1: i32) -> (i32, i32) {
    %c0_i32 = arith.constant 0 : i32
    %c0_i32_0 = arith.constant 0 : i32
    return %c0_i32, %arg1 : i32, i32
  }
  func.func @transform_4(%arg0: i32, %arg1: i32) -> (i32, i32) {
    %c0_i32 = arith.constant 0 : i32
    %c0_i32_0 = arith.constant 0 : i32
    return %c0_i32, %arg1 : i32, i32
  }
  func.func @transform_5(%arg0: i32, %arg1: i32) -> (i32, i32) {
    %c0_i32 = arith.constant 0 : i32
    return %arg0, %arg1 : i32, i32
  }
}

</mosaic_0001>

<llo_original>
// kernel: tpu_custom_call.1
$region0: #{tpu_custom_call.1}
  #allocation0 [shape = 'u32[]', space=smem, size = 0x4, offset = 0x4, fixed_abs, tag = 'smem constant byte address 0x4 - core index']
  #allocation1 [shape = 'u32[144,128]{1,0:T(1,128)}', space=vmem, size = 0x12000, scoped, tag = 'internal scratch']
  %s0 = inlined_call_operand.hbm [shape: f32[16,128], index: 0, kind: input, shape index: {}]
  %s1 = inlined_call_operand.vmem [shape: f32[1,128], index: 1, kind: input, shape index: {}]
  %s2 = inlined_call_operand.vmem [shape: f32[1,128], index: 2, kind: input, shape index: {}]
  %s3 = inlined_call_operand.hbm [shape: f32[128,128], index: 3, kind: input, shape index: {}]
  %s4 = inlined_call_operand.vmem [shape: f32[1,128], index: 4, kind: input, shape index: {}]
  %s5 = inlined_call_operand.hbm [shape: f32[16,128], index: 5, kind: output, shape index: {}]
  %s6 = sld [smem:[#allocation0]]
  $region38: #{tpu_custom_call.1} parent=0
    _
  %s8 = ssub.s32 1, %s6
  %s9 = scalar_select 0, %s8, %s6
  $region1: #{tpu_custom_call.1} parent=0
    #allocation2 [shape = 'u8[8192]{0}', space=vmem, size = 0x2000, scoped, tag = 'input window, operand 0, single buffered']
    #allocation3 [shape = 's32[1]{0}', space=sflag, size = 0x4, scoped, tag = 'scoped memory for tpu_custom_call.1']
    #allocation4 [shape = 's32[1]{0}', space=sflag, size = 0x4, scoped, tag = 'scoped memory for tpu_custom_call.1']
    #allocation5 [shape = 'u8[65536]{0}', space=vmem, size = 0x10000, scoped, tag = 'input window, operand 3, single buffered']
    #allocation6 [shape = 's32[1]{0}', space=sflag, size = 0x4, scoped, tag = 'scoped memory for tpu_custom_call.1']
    #allocation7 [shape = 'u8[8192]{0}', space=vmem, size = 0x2000, scoped, tag = 'output window, operand 0, single buffered']
    %10 = vsyncpa [#allocation3], 0
    %11 = vsyncpa [#allocation6], 0
    %12 = vsyncpa [#allocation4], 0
    // Predicated region
    $region2: #{tpu_custom_call.1} parent=1 // pred_check
      _
    $region3: #{tpu_custom_call.1} parent=1 // pred_check_branch
      %14 = sbr.rel (0) target = $region5
    $region4: #{tpu_custom_call.1} parent=1 // pred_region
      %s16 = ssub.s32 256, 256
      %17 = vsyncadd [#allocation3], %s16
      %s18 = sshll.u32 [#allocation2], 4
      %s19 = int_to_ptr.vmem [resolvable:$true] %s18
      %24 = dma.hbm_to_vmem [thread:$0]  %s0, 256, %s19, [#allocation3], 128, 128, 8
    $region5: #{tpu_custom_call.1} parent=1 // pred_fallthru
      _
    // Predicated region
    $region6: #{tpu_custom_call.1} parent=1 // pred_check
      _
    $region7: #{tpu_custom_call.1} parent=1 // pred_check_branch
      %26 = sbr.rel (0) target = $region9
    $region8: #{tpu_custom_call.1} parent=1 // pred_region
      _
    $region9: #{tpu_custom_call.1} parent=1 // pred_fallthru
      _
    // Predicated region
    $region10: #{tpu_custom_call.1} parent=1 // pred_check
      _
    $region11: #{tpu_custom_call.1} parent=1 // pred_check_branch
      %28 = sbr.rel (0) target = $region13
    $region12: #{tpu_custom_call.1} parent=1 // pred_region
      _
    $region13: #{tpu_custom_call.1} parent=1 // pred_fallthru
      _
    // Predicated region
    $region14: #{tpu_custom_call.1} parent=1 // pred_check
      _
    $region15: #{tpu_custom_call.1} parent=1 // pred_check_branch
      %30 = sbr.rel (0) target = $region17
    $region16: #{tpu_custom_call.1} parent=1 // pred_region
      %s32 = ssub.s32 2048, 2048
      %33 = vsyncadd [#allocation6], %s32
      %s34 = sshll.u32 [#allocation5], 4
      %s35 = int_to_ptr.vmem [resolvable:$true] %s34
      %40 = dma.hbm_to_vmem [thread:$0]  %s3, 2048, %s35, [#allocation6], 128, 128, 8
    $region17: #{tpu_custom_call.1} parent=1 // pred_fallthru
      _
    // Predicated region
    $region18: #{tpu_custom_call.1} parent=1 // pred_check
      _
    $region19: #{tpu_custom_call.1} parent=1 // pred_check_branch
      %42 = sbr.rel (0) target = $region21
    $region20: #{tpu_custom_call.1} parent=1 // pred_region
      _
    $region21: #{tpu_custom_call.1} parent=1 // pred_fallthru
      _
    // Predicated region
    $region22: #{tpu_custom_call.1} parent=1 // pred_check
      _
    $region23: #{tpu_custom_call.1} parent=1 // pred_check_branch
      %44 = sbr.rel (0) target = $region25
    $region24: #{tpu_custom_call.1} parent=1 // pred_region
      %45 = dma.done [#allocation3], 256
    $region25: #{tpu_custom_call.1} parent=1 // pred_fallthru
      _
    // Predicated region
    $region26: #{tpu_custom_call.1} parent=1 // pred_check
      _
    $region27: #{tpu_custom_call.1} parent=1 // pred_check_branch
      %47 = sbr.rel (0) target = $region29
    $region28: #{tpu_custom_call.1} parent=1 // pred_region
      %48 = dma.done [#allocation6], 2048
    $region29: #{tpu_custom_call.1} parent=1 // pred_fallthru
      _
    %v49 = vld [vmem:[#allocation2] sm:$0xff]
    %v50 = vld [vmem:[#allocation2 + $0x8] sm:$0xff]
    %51 = vadd.xlane.f32.xlu0 %v49
    %v52 = vpop.xlane.xlu0 %51
    %53 = vadd.xlane.f32.xlu0 %v50
    %v54 = vpop.xlane.xlu0 %53
    %v55 = vmul.f32 %v49, %v49
    %v56 = vmul.f32 %v50, %v50
    %57 = vadd.xlane.f32.xlu0 %v55
    %v58 = vpop.xlane.xlu0 %57
    %59 = vadd.xlane.f32.xlu0 %v56
    %v60 = vpop.xlane.xlu0 %59
    %v61 = vmul.f32 %v52, 0.03125
    %v62 = vmul.f32 %v54, 0.03125
    %v63 = vmul.f32 %v58, 0.03125
    %v64 = vmul.f32 %v60, 0.03125
    %v65 = vmul.f32 %v61, %v61
    %v66 = vmul.f32 %v62, %v62
    %v67 = vsub.f32 %v63, %v65
    %v68 = vsub.f32 %v64, %v66
    %v69 = vadd.f32 %v67, 1e-05
    %v70 = vadd.f32 %v68, 1e-05
    %v71 = vrsqrt.pop %v69
    %v72 = vrsqrt.pop %v70
    %v73 = vsub.f32 %v49, %v61
    %v74 = vsub.f32 %v50, %v62
    %v75 = vmul.f32 %v73, %v71
    %v76 = vmul.f32 %v74, %v72
    %v77 = vld [vmem:[%s1] sm:$0x1]
    %v79 = vlaneseq
    %v80 = vshrl.u32 %v79, 7
    %v81 = vsub.s32 0, %v80
    %v82 = vrot.slane %v77, %v81
    %v84 = vmul.f32 %v75, %v82
    %v85 = vmul.f32 %v76, %v82
    %v86 = vld [vmem:[%s2] sm:$0x1]
    %v88 = vlaneseq
    %v89 = vshrl.u32 %v88, 7
    %v90 = vsub.s32 0, %v89
    %v91 = vrot.slane %v86, %v90
    %v93 = vadd.f32 %v84, %v91
    %v94 = vadd.f32 %v85, %v91
    %v95 = vld [vmem:[#allocation5] sm:$0xff]
    %v96 = vld [vmem:[#allocation5 + $0x8] sm:$0xff]
    %v97 = vld [vmem:[#allocation5 + $0x10] sm:$0xff]
    %v98 = vld [vmem:[#allocation5 + $0x18] sm:$0xff]
    %v99 = vld [vmem:[#allocation5 + $0x20] sm:$0xff]
    %v100 = vld [vmem:[#allocation5 + $0x28] sm:$0xff]
    %v101 = vld [vmem:[#allocation5 + $0x30] sm:$0xff]
    %v102 = vld [vmem:[#allocation5 + $0x38] sm:$0xff]
    %v103 = vld [vmem:[#allocation5 + $0x40] sm:$0xff]
    %v104 = vld [vmem:[#allocation5 + $0x48] sm:$0xff]
    %v105 = vld [vmem:[#allocation5 + $0x50] sm:$0xff]
    %v106 = vld [vmem:[#allocation5 + $0x58] sm:$0xff]
    %v107 = vld [vmem:[#allocation5 + $0x60] sm:$0xff]
    %v108 = vld [vmem:[#allocation5 + $0x68] sm:$0xff]
    %v109 = vld [vmem:[#allocation5 + $0x70] sm:$0xff]
    %v110 = vld [vmem:[#allocation5 + $0x78] sm:$0xff]
    %v111 = vld [vmem:[%s4] sm:$0x1]
    %v113 = vlaneseq
    %v114 = vshrl.u32 %v113, 7
    %v115 = vsub.s32 0, %v114
    %v116 = vrot.slane %v111, %v115
    %118 = vmatprep.subr.mxu0 0.0
    %119 = vmatpush1.msra.mxu0 %v110
    %120 = vmatprep.subr.mxu0 0.0
    %121 = vmatpush1.msra.mxu0 %v109
    %122 = vmatprep.subr.mxu0 0.0
    %123 = vmatpush1.msra.mxu0 %v108
    %124 = vmatprep.subr.mxu0 0.0
    %125 = vmatpush1.msra.mxu0 %v107
    %126 = vmatprep.subr.mxu0 0.0
    %127 = vmatpush1.msra.mxu0 %v106
    %128 = vmatprep.subr.mxu0 0.0
    %129 = vmatpush1.msra.mxu0 %v105
    %130 = vmatprep.subr.mxu0 0.0
    %131 = vmatpush1.msra.mxu0 %v104
    %132 = vmatprep.subr.mxu0 0.0
    %133 = vmatpush1.msra.mxu0 %v103
    %134 = vmatprep.subr.mxu0 0.0
    %135 = vmatpush1.msra.mxu0 %v102
    %136 = vmatprep.subr.mxu0 0.0
    %137 = vmatpush1.msra.mxu0 %v101
    %138 = vmatprep.subr.mxu0 0.0
    %139 = vmatpush1.msra.mxu0 %v100
    %140 = vmatprep.subr.mxu0 0.0
    %141 = vmatpush1.msra.mxu0 %v99
    %142 = vmatprep.subr.mxu0 0.0
    %143 = vmatpush1.msra.mxu0 %v98
    %144 = vmatprep.subr.mxu0 0.0
    %145 = vmatpush1.msra.mxu0 %v97
    %146 = vmatprep.subr.mxu0 0.0
    %147 = vmatpush1.msra.mxu0 %v96
    %148 = vmatprep.subr.mxu0 0.0
    %149 = vmatpush1.msra.mxu0 %v95
    %150 = vmatprep.subr.mxu0 0.0
    %151 = vmatpush2.msra.mxu0 0.0
    %152 = vmatprep.subr.mxu0 0.0
    %153 = vmatpush2.msra.mxu0 0.0
    %154 = vmatprep.subr.mxu0 0.0
    %155 = vmatpush2.msra.mxu0 0.0
    %156 = vmatprep.subr.mxu0 0.0
    %157 = vmatpush2.msra.mxu0 0.0
    %158 = vmatprep.subr.mxu0 0.0
    %159 = vmatpush2.msra.mxu0 0.0
    %160 = vmatprep.subr.mxu0 0.0
    %161 = vmatpush2.msra.mxu0 0.0
    %162 = vmatprep.subr.mxu0 0.0
    %163 = vmatpush2.msra.mxu0 0.0
    %164 = vmatprep.subr.mxu0 0.0
    %165 = vmatpush2.msra.mxu0 0.0
    %166 = vmatprep.subr.mxu0 0.0
    %167 = vmatpush2.msra.mxu0 0.0
    %168 = vmatprep.subr.mxu0 0.0
    %169 = vmatpush2.msra.mxu0 0.0
    %170 = vmatprep.subr.mxu0 0.0
    %171 = vmatpush2.msra.mxu0 0.0
    %172 = vmatprep.subr.mxu0 0.0
    %173 = vmatpush2.msra.mxu0 0.0
    %174 = vmatprep.subr.mxu0 0.0
    %175 = vmatpush2.msra.mxu0 0.0
    %176 = vmatprep.subr.mxu0 0.0
    %177 = vmatpush2.msra.mxu0 0.0
    %178 = vmatprep.subr.mxu0 0.0
    %179 = vmatpush2.msra.mxu0 0.0
    %180 = vmatprep.subr.mxu0 0.0
    %181 = vmatpush2.msra.mxu0 0.0
    %182 = vmatprep.mubr.f32.mxu0 0.0
    %183 = vmatmul.mubr.f32.gmra.mxu0 %v93
    %v184 = vpop.f32.mrf.mxu0
    %v185 = vadd.f32 %v116, %v184
    %v186 = vpop.f32.mrf.mxu0
    %187 = vmatprep.mubr.f32.mxu0 0.0
    %188 = vmatmul.mubr.f32.gmra.mxu0 %v94
    %v189 = vpop.f32.mrf.mxu0
    %v190 = vadd.f32 %v116, %v189
    %v191 = vpop.f32.mrf.mxu0
    %192 = vdwg.mxu0
    %193 = vst [vmem:[#allocation7] sm:$0xff] %v185
    %194 = vst [vmem:[#allocation7 + $0x8] sm:$0xff] %v190
    // Predicated region
    $region30: #{tpu_custom_call.1} parent=1 // pred_check
      _
    $region31: #{tpu_custom_call.1} parent=1 // pred_check_branch
      %196 = sbr.rel (0) target = $region33
    $region32: #{tpu_custom_call.1} parent=1 // pred_region
      %s198 = ssub.s32 256, 256
      %199 = vsyncadd [#allocation4], %s198
      %s200 = sshll.u32 [#allocation7], 4
      %s201 = int_to_ptr.vmem [resolvable:$true] %s200
      %206 = dma.vmem_to_hbm [thread:$0]  %s201, 256, %s5, [#allocation4], 128, 128, 8
    $region33: #{tpu_custom_call.1} parent=1 // pred_fallthru
      _
    // Predicated region
    $region34: #{tpu_custom_call.1} parent=1 // pred_check
      _
    $region35: #{tpu_custom_call.1} parent=1 // pred_check_branch
      %208 = sbr.rel (0) target = $region37
    $region36: #{tpu_custom_call.1} parent=1 // pred_region
      %209 = dma.done [#allocation4], 256
    $region37: #{tpu_custom_call.1} parent=1 // pred_fallthru
      _
    %210 = vsyncpa [#allocation3], 1
    %211 = vsyncpa [#allocation6], 1
    %212 = vsyncpa [#allocation4], 1

</llo_original>
